<compile_context>
chip_gen: v6e
topology: v6e:2x2x1
jax: 0.10.0
libtpu: 0.0.40
codegen_flags: <defaults>
</compile_context>

<pallas_src>
import functools

import jax
import jax.numpy as jnp
from jax.experimental import pallas as pl
from jax.experimental.pallas import tpu as pltpu

IN_SIZE = 6
HIDDEN = 128
OUT_SIZE = 28 * 28  # 784 = 6*128 + 16 -> last 16 lanes use a masked tail store (cheap)


def _round_up(n, m):
    return ((n + m - 1) // m) * m


def _state_stack_kernel(x_ref, w1_ref, b1_ref, w2_ref, b2_ref, o_ref):
    # x_ref : (tb, IN_SIZE)       f32   (batch tile, pipelined over the grid)
    # w1_ref: (IN_SIZE, HIDDEN)   f32   (VMEM-resident across all batch tiles)
    # b1_ref: (1, HIDDEN)         f32
    # w2_ref: (HIDDEN, OUT_SIZE)  bf16  (VMEM-resident)
    # b2_ref: (1, OUT_SIZE)       f32
    # o_ref : (tb, OUT_SIZE)      f32
    x = x_ref[...]

    # Layer 1: K=6 badly underfills the MXU contraction dim -> 6-term VPU broadcast FMA.
    # (If a v7x bundle profile ever shows VALU binding, swap this for an (tb,8)@(8,128)
    #  bf16 MXU dot with x/W1 zero-padded to K=8.)
    h = x[:, 0:1] * w1_ref[0:1, :]
    for k in range(1, IN_SIZE):
        h = h + x[:, k:k + 1] * w1_ref[k:k + 1, :]
    h = jnp.maximum(h + b1_ref[...], 0.0)

    # Layer 2: (tb,128)@(128,784) on the MXU, bf16 operands, f32 accumulation.
    y = jnp.dot(h.astype(w2_ref.dtype), w2_ref[...],
                preferred_element_type=jnp.float32)
    y = jnp.maximum(y + b2_ref[...], 0.0)

    o_ref[...] = y.astype(o_ref.dtype)


def prepare_params(w1, b1, w2, b2):
    """One-time parameter formatting (do this OUTSIDE the per-step hot path)."""
    return (
        w1.astype(jnp.float32),                           # (6, 128)
        b1.reshape(1, HIDDEN).astype(jnp.float32),        # (1, 128)
        w2.astype(jnp.bfloat16),                          # (128, 784) bf16 resident
        b2.reshape(1, OUT_SIZE).astype(jnp.float32),      # (1, 784)
    )


@functools.partial(jax.jit, static_argnames=("block_b",))
def state_stack_forward(x, w1_f32, b1_2d, w2_bf16, b2_2d, *, block_b=512):
    """x: (B, 6) f32 -> (B, 1, 28, 28) f32 (matches torch NCHW output).

    Params must be pre-formatted via prepare_params().
    """
    B = x.shape[0]

    # Target ~4 batch tiles (>=2 per TensorCore on v7x megacore), tile rows multiple of 8,
    # capped at block_b so double-buffered (tb, 784) f32 output tiles stay well inside
    # v5e's 16 MiB scoped-VMEM default (and v6e/v7x's 32 MiB).
    tb = max(8, min(block_b, _round_up(pl.cdiv(B, 4), 8)))
    bp = _round_up(B, tb)
    n_tiles = bp // tb

    x_p = x if bp == B else jnp.pad(x, ((0, bp - B), (0, 0)))

    cost = pl.CostEstimate(
        flops=2 * bp * (IN_SIZE * HIDDEN + HIDDEN * OUT_SIZE),
        transcendentals=0,
        bytes_accessed=(bp * IN_SIZE * 4            # x
                        + IN_SIZE * HIDDEN * 4      # w1
                        + HIDDEN * 4                # b1
                        + HIDDEN * OUT_SIZE * 2     # w2 (bf16)
                        + OUT_SIZE * 4              # b2
                        + bp * OUT_SIZE * 4),       # out (dominant term)
    )

    out = pl.pallas_call(
        _state_stack_kernel,
        out_shape=jax.ShapeDtypeStruct((bp, OUT_SIZE), jnp.float32),
        grid=(n_tiles,),
        in_specs=[
            pl.BlockSpec((tb, IN_SIZE), lambda i: (i, 0)),        # x: tiled over batch
            pl.BlockSpec((IN_SIZE, HIDDEN), lambda i: (0, 0)),    # w1: resident
            pl.BlockSpec((1, HIDDEN), lambda i: (0, 0)),          # b1: resident
            pl.BlockSpec((HIDDEN, OUT_SIZE), lambda i: (0, 0)),   # w2: resident (bf16)
            pl.BlockSpec((1, OUT_SIZE), lambda i: (0, 0)),        # b2: resident
        ],
        out_specs=pl.BlockSpec((tb, OUT_SIZE), lambda i: (i, 0)),
        compiler_params=pltpu.CompilerParams(
            dimension_semantics=("parallel",),  # batch tiles independent -> v7x megacore
        ),
        cost_estimate=cost,
    )(x_p, w1_f32, b1_2d, w2_bf16, b2_2d)

    if bp != B:               # only pay the slice when the batch was actually padded
        out = out[:B]

    # torch: x.view(-1, 28, 28).unsqueeze(1) -> (B, 1, 28, 28). Metadata-only reshape;
    # consumers that can take (B, 784) directly should use `out` before this line.
    return out.reshape(B, 1, 28, 28)


def init_params(key):
    """Deterministic synthetic parameters with nn.Linear-like fan-in scaling."""
    k1, k2, k3, k4 = jax.random.split(key, 4)
    s1 = 1.0 / jnp.sqrt(IN_SIZE)
    s2 = 1.0 / jnp.sqrt(HIDDEN)
    # stored as (in, out) -- transposed relative to torch's (out, in) weight layout
    w1 = jax.random.uniform(k1, (IN_SIZE, HIDDEN), jnp.float32, -s1, s1)
    b1 = jax.random.uniform(k2, (HIDDEN,), jnp.float32, -s1, s1)
    w2 = jax.random.uniform(k3, (HIDDEN, OUT_SIZE), jnp.float32, -s2, s2)
    b2 = jax.random.uniform(k4, (OUT_SIZE,), jnp.float32, -s2, s2)
    return w1, b1, w2, b2


def _check(x, w1, b1, w2, b2, out):
    hi = jax.lax.Precision.HIGHEST
    B = x.shape[0]
    # Reference mirroring the kernel's numerics (bf16 second-layer operands, f32 accumulate).
    h_ref = jnp.maximum(jnp.dot(x, w1, precision=hi) + b1, 0.0)
    y_mir = jnp.dot(h_ref.astype(jnp.bfloat16), w2.astype(jnp.bfloat16),
                    preferred_element_type=jnp.float32, precision=hi) + b2
    ref_mir = jnp.maximum(y_mir, 0.0).reshape(B, 1, 28, 28)
    assert jnp.allclose(out, ref_mir, atol=5e-3, rtol=5e-3), \
        float(jnp.max(jnp.abs(out - ref_mir)))
    # Sanity vs the full-f32 torch-equivalent forward (bf16 weight drift only).
    ref_f32 = jnp.maximum(jnp.dot(h_ref, w2, precision=hi) + b2, 0.0).reshape(B, 1, 28, 28)
    assert jnp.allclose(out, ref_f32, atol=5e-2, rtol=5e-2), \
        float(jnp.max(jnp.abs(out - ref_f32)))


if __name__ == "__main__":
    key = jax.random.PRNGKey(0)
    kx, kx2, kp = jax.random.split(key, 3)

    w1, b1, w2, b2 = init_params(kp)
    params = prepare_params(w1, b1, w2, b2)   # one-time, outside the hot path

    # Typical usage batch: action deltas + gripper angle/switch/height -> (B, 6).
    B = 8
    x = jax.random.normal(kx, (B, IN_SIZE), jnp.float32)
    out = jax.block_until_ready(state_stack_forward(x, *params))
    assert out.shape == (B, 1, 28, 28), out.shape
    _check(x, w1, b1, w2, b2, out)

    # Second shape exercises the multi-tile grid + batch-padding path (tb=16, 4 tiles).
    B2 = 50
    x2 = jax.random.normal(kx2, (B2, IN_SIZE), jnp.float32)
    out2 = jax.block_until_ready(state_stack_forward(x2, *params))
    assert out2.shape == (B2, 1, 28, 28), out2.shape
    _check(x2, w1, b1, w2, b2, out2)

    print("KERNEL_OK")
</pallas_src>

<mosaic_0001>
module attributes {stable_mosaic.version = 11 : i64} {
  func.func @_state_stack_kernel(%arg0: i32, %arg1: memref<8x6xf32, #tpu.memory_space<vmem>>, %arg2: memref<6x128xf32, #tpu.memory_space<vmem>>, %arg3: memref<1x128xf32, #tpu.memory_space<vmem>>, %arg4: memref<128x784xbf16, #tpu.memory_space<vmem>>, %arg5: memref<1x784xf32, #tpu.memory_space<vmem>>, %arg6: memref<8x784xf32, #tpu.memory_space<vmem>>) attributes {dimension_semantics = [#tpu.dimension_semantics<parallel>], iteration_bounds = array<i64: 1>, scalar_prefetch = 0 : i64, scratch_operands = 0 : i64, tpu.core_type = #tpu.core_type<tc>, window_params = [{transform_indices = @transform_0, window_bounds = array<i64: 8, 6>}, {pipeline_mode = #tpu.pipeline_mode<synchronous>, transform_indices = @transform_1, window_bounds = array<i64: 6, 128>}, {pipeline_mode = #tpu.pipeline_mode<synchronous>, transform_indices = @transform_2, window_bounds = array<i64: 1, 128>}, {pipeline_mode = #tpu.pipeline_mode<synchronous>, transform_indices = @transform_3, window_bounds = array<i64: 128, 784>}, {pipeline_mode = #tpu.pipeline_mode<synchronous>, transform_indices = @transform_4, window_bounds = array<i64: 1, 784>}, {transform_indices = @transform_5, window_bounds = array<i64: 8, 784>}]} {
    %c0 = arith.constant 0 : index
    %c0_0 = arith.constant 0 : index
    %0 = vector.load %arg1[%c0, %c0_0] : memref<8x6xf32, #tpu.memory_space<vmem>>, vector<8x6xf32>
    %1 = vector.extract_strided_slice %0 {offsets = [0, 0], sizes = [8, 1], strides = [1, 1]} : vector<8x6xf32> to vector<8x1xf32>
    %c0_1 = arith.constant 0 : index
    %c0_2 = arith.constant 0 : index
    %2 = vector.load %arg2[%c0_1, %c0_2] : memref<6x128xf32, #tpu.memory_space<vmem>>, vector<1x128xf32>
    %3 = vector.broadcast %1 : vector<8x1xf32> to vector<8x128xf32>
    %4 = vector.broadcast %2 : vector<1x128xf32> to vector<8x128xf32>
    %5 = arith.mulf %3, %4 : vector<8x128xf32>
    %6 = vector.extract_strided_slice %0 {offsets = [0, 1], sizes = [8, 1], strides = [1, 1]} : vector<8x6xf32> to vector<8x1xf32>
    %c1 = arith.constant 1 : index
    %c0_3 = arith.constant 0 : index
    %7 = vector.load %arg2[%c1, %c0_3] : memref<6x128xf32, #tpu.memory_space<vmem>>, vector<1x128xf32>
    %8 = vector.broadcast %6 : vector<8x1xf32> to vector<8x128xf32>
    %9 = vector.broadcast %7 : vector<1x128xf32> to vector<8x128xf32>
    %10 = arith.mulf %8, %9 : vector<8x128xf32>
    %11 = arith.addf %5, %10 : vector<8x128xf32>
    %12 = vector.extract_strided_slice %0 {offsets = [0, 2], sizes = [8, 1], strides = [1, 1]} : vector<8x6xf32> to vector<8x1xf32>
    %c2 = arith.constant 2 : index
    %c0_4 = arith.constant 0 : index
    %13 = vector.load %arg2[%c2, %c0_4] : memref<6x128xf32, #tpu.memory_space<vmem>>, vector<1x128xf32>
    %14 = vector.broadcast %12 : vector<8x1xf32> to vector<8x128xf32>
    %15 = vector.broadcast %13 : vector<1x128xf32> to vector<8x128xf32>
    %16 = arith.mulf %14, %15 : vector<8x128xf32>
    %17 = arith.addf %11, %16 : vector<8x128xf32>
    %18 = vector.extract_strided_slice %0 {offsets = [0, 3], sizes = [8, 1], strides = [1, 1]} : vector<8x6xf32> to vector<8x1xf32>
    %c3 = arith.constant 3 : index
    %c0_5 = arith.constant 0 : index
    %19 = vector.load %arg2[%c3, %c0_5] : memref<6x128xf32, #tpu.memory_space<vmem>>, vector<1x128xf32>
    %20 = vector.broadcast %18 : vector<8x1xf32> to vector<8x128xf32>
    %21 = vector.broadcast %19 : vector<1x128xf32> to vector<8x128xf32>
    %22 = arith.mulf %20, %21 : vector<8x128xf32>
    %23 = arith.addf %17, %22 : vector<8x128xf32>
    %24 = vector.extract_strided_slice %0 {offsets = [0, 4], sizes = [8, 1], strides = [1, 1]} : vector<8x6xf32> to vector<8x1xf32>
    %c4 = arith.constant 4 : index
    %c0_6 = arith.constant 0 : index
    %25 = vector.load %arg2[%c4, %c0_6] : memref<6x128xf32, #tpu.memory_space<vmem>>, vector<1x128xf32>
    %26 = vector.broadcast %24 : vector<8x1xf32> to vector<8x128xf32>
    %27 = vector.broadcast %25 : vector<1x128xf32> to vector<8x128xf32>
    %28 = arith.mulf %26, %27 : vector<8x128xf32>
    %29 = arith.addf %23, %28 : vector<8x128xf32>
    %30 = vector.extract_strided_slice %0 {offsets = [0, 5], sizes = [8, 1], strides = [1, 1]} : vector<8x6xf32> to vector<8x1xf32>
    %c5 = arith.constant 5 : index
    %c0_7 = arith.constant 0 : index
    %31 = vector.load %arg2[%c5, %c0_7] : memref<6x128xf32, #tpu.memory_space<vmem>>, vector<1x128xf32>
    %32 = vector.broadcast %30 : vector<8x1xf32> to vector<8x128xf32>
    %33 = vector.broadcast %31 : vector<1x128xf32> to vector<8x128xf32>
    %34 = arith.mulf %32, %33 : vector<8x128xf32>
    %35 = arith.addf %29, %34 : vector<8x128xf32>
    %c0_8 = arith.constant 0 : index
    %c0_9 = arith.constant 0 : index
    %36 = vector.load %arg3[%c0_8, %c0_9] : memref<1x128xf32, #tpu.memory_space<vmem>>, vector<1x128xf32>
    %37 = vector.broadcast %36 : vector<1x128xf32> to vector<8x128xf32>
    %38 = arith.addf %35, %37 : vector<8x128xf32>
    %cst = arith.constant 0.000000e+00 : f32
    %39 = vector.broadcast %cst : f32 to vector<8x128xf32>
    %40 = arith.maximumf %38, %39 : vector<8x128xf32>
    %41 = arith.truncf %40 : vector<8x128xf32> to vector<8x128xbf16>
    %c0_10 = arith.constant 0 : index
    %c0_11 = arith.constant 0 : index
    %42 = vector.load %arg4[%c0_10, %c0_11] : memref<128x784xbf16, #tpu.memory_space<vmem>>, vector<128x784xbf16>
    %cst_12 = arith.constant dense<0.000000e+00> : vector<8x784xf32>
    %43 = tpu.matmul %41, %42, %cst_12 {dimension_numbers = #tpu.dot_dimension_numbers<[1], [0], [0], [1], [0, 0, 1, 1], [], []>} : vector<8x128xbf16>, vector<128x784xbf16>, vector<8x784xf32> -> vector<8x784xf32>
    %c0_13 = arith.constant 0 : index
    %c0_14 = arith.constant 0 : index
    %44 = vector.load %arg5[%c0_13, %c0_14] : memref<1x784xf32, #tpu.memory_space<vmem>>, vector<1x784xf32>
    %45 = vector.broadcast %44 : vector<1x784xf32> to vector<8x784xf32>
    %46 = arith.addf %43, %45 : vector<8x784xf32>
    %cst_15 = arith.constant 0.000000e+00 : f32
    %47 = vector.broadcast %cst_15 : f32 to vector<8x784xf32>
    %48 = arith.maximumf %46, %47 : vector<8x784xf32>
    %c0_16 = arith.constant 0 : index
    %c0_17 = arith.constant 0 : index
    %49 = vector.load %arg6[%c0_16, %c0_17] : memref<8x784xf32, #tpu.memory_space<vmem>>, vector<8x784xf32>
    tpu.vector_store %arg6[%c0_16, %c0_17], %48 {strides = array<i32>} : memref<8x784xf32, #tpu.memory_space<vmem>>, vector<8x784xf32>,
    return
  }
  func.func @transform_0(%arg0: i32) -> (i32, i32) {
    %c0_i32 = arith.constant 0 : i32
    %c0_i32_0 = arith.constant 0 : i32
    return %arg0, %c0_i32 : i32, i32
  }
  func.func @transform_1(%arg0: i32) -> (i32, i32) {
    %c0_i32 = arith.constant 0 : i32
    %c0_i32_0 = arith.constant 0 : i32
    %c0_i32_1 = arith.constant 0 : i32
    return %c0_i32, %c0_i32_0 : i32, i32
  }
  func.func @transform_2(%arg0: i32) -> (i32, i32) {
    %c0_i32 = arith.constant 0 : i32
    %c0_i32_0 = arith.constant 0 : i32
    %c0_i32_1 = arith.constant 0 : i32
    return %c0_i32, %c0_i32_0 : i32, i32
  }
  func.func @transform_3(%arg0: i32) -> (i32, i32) {
    %c0_i32 = arith.constant 0 : i32
    %c0_i32_0 = arith.constant 0 : i32
    %c0_i32_1 = arith.constant 0 : i32
    return %c0_i32, %c0_i32_0 : i32, i32
  }
  func.func @transform_4(%arg0: i32) -> (i32, i32) {
    %c0_i32 = arith.constant 0 : i32
    %c0_i32_0 = arith.constant 0 : i32
    %c0_i32_1 = arith.constant 0 : i32
    return %c0_i32, %c0_i32_0 : i32, i32
  }
  func.func @transform_5(%arg0: i32) -> (i32, i32) {
    %c0_i32 = arith.constant 0 : i32
    %c0_i32_0 = arith.constant 0 : i32
    return %arg0, %c0_i32 : i32, i32
  }
}

</mosaic_0001>

<llo_original>
// kernel: state_stack_forward.1
$region0: #{state_stack_forward.1}
  #allocation0 [shape = 'u32[]', space=smem, size = 0x4, offset = 0x4, fixed_abs, tag = 'smem constant byte address 0x4 - core index']
  #allocation1 [shape = 'u32[144,128]{1,0:T(1,128)}', space=vmem, size = 0x12000, scoped, tag = 'internal scratch']
  %s0 = inlined_call_operand.vmem [shape: f32[8,6], index: 0, kind: input, shape index: {}]
  %s1 = inlined_call_operand.vmem [shape: f32[6,128], index: 1, kind: input, shape index: {}]
  %s2 = inlined_call_operand.vmem [shape: f32[1,128], index: 2, kind: input, shape index: {}]
  %s3 = inlined_call_operand.vmem [shape: bf16[128,784], index: 3, kind: input, shape index: {}]
  %s4 = inlined_call_operand.vmem [shape: f32[1,784], index: 4, kind: input, shape index: {}]
  %s5 = inlined_call_operand.vmem [shape: f32[8,784], index: 5, kind: output, shape index: {}]
  %s6 = sld [smem:[#allocation0]]
  $region30: #{state_stack_forward.1} parent=0
    _
  %s8 = ssub.s32 1, %s6
  %s9 = scalar_select 0, %s8, %s6
  // Predicated region
  $region2: #{state_stack_forward.1} parent=0 // pred_check
    _
  $region3: #{state_stack_forward.1} parent=0 // pred_check_branch
    %11 = sbr.rel (0) target = $region5
  $region4: #{state_stack_forward.1} parent=0 // pred_region
    _
  $region5: #{state_stack_forward.1} parent=0 // pred_fallthru
    _
  // Predicated region
  $region6: #{state_stack_forward.1} parent=0 // pred_check
    _
  $region7: #{state_stack_forward.1} parent=0 // pred_check_branch
    %13 = sbr.rel (0) target = $region9
  $region8: #{state_stack_forward.1} parent=0 // pred_region
    _
  $region9: #{state_stack_forward.1} parent=0 // pred_fallthru
    _
  // Predicated region
  $region10: #{state_stack_forward.1} parent=0 // pred_check
    _
  $region11: #{state_stack_forward.1} parent=0 // pred_check_branch
    %15 = sbr.rel (0) target = $region13
  $region12: #{state_stack_forward.1} parent=0 // pred_region
    _
  $region13: #{state_stack_forward.1} parent=0 // pred_fallthru
    _
  // Predicated region
  $region14: #{state_stack_forward.1} parent=0 // pred_check
    _
  $region15: #{state_stack_forward.1} parent=0 // pred_check_branch
    %17 = sbr.rel (0) target = $region17
  $region16: #{state_stack_forward.1} parent=0 // pred_region
    _
  $region17: #{state_stack_forward.1} parent=0 // pred_fallthru
    _
  // Predicated region
  $region18: #{state_stack_forward.1} parent=0 // pred_check
    _
  $region19: #{state_stack_forward.1} parent=0 // pred_check_branch
    %19 = sbr.rel (0) target = $region21
  $region20: #{state_stack_forward.1} parent=0 // pred_region
    _
  $region21: #{state_stack_forward.1} parent=0 // pred_fallthru
    _
  %v21 = vld [vmem:[%s0] sm:$0xff]
  %v22 = vld [vmem:[%s1] sm:$0x1]
  %24 = vset.pattern.permute.xlu0 0
  %25 = vperm.xlu0 %24, %v21
  %v26 = vpop.permute.xlu0 %25
  %v28 = vlaneseq
  %v29 = vshrl.u32 %v28, 7
  %v30 = vsub.s32 0, %v29
  %v31 = vrot.slane %v22, %v30
  %v32 = vmul.f32 %v26, %v31
  %v33 = vld [vmem:[%s1 + $0x1] sm:$0x1]
  %34 = vset.pattern.permute.xlu0 1
  %35 = vperm.xlu0 %34, %v21
  %v36 = vpop.permute.xlu0 %35
  %v38 = vlaneseq
  %v39 = vshrl.u32 %v38, 7
  %v40 = vsub.s32 0, %v39
  %v41 = vrot.slane %v33, %v40
  %v42 = vmul.f32 %v36, %v41
  %v43 = vadd.f32 %v32, %v42
  %v44 = vld [vmem:[%s1 + $0x2] sm:$0x1]
  %45 = vset.pattern.permute.xlu0 2
  %46 = vperm.xlu0 %45, %v21
  %v47 = vpop.permute.xlu0 %46
  %v49 = vlaneseq
  %v50 = vshrl.u32 %v49, 7
  %v51 = vsub.s32 0, %v50
  %v52 = vrot.slane %v44, %v51
  %v53 = vmul.f32 %v47, %v52
  %v54 = vadd.f32 %v43, %v53
  %v55 = vld [vmem:[%s1 + $0x3] sm:$0x1]
  %56 = vset.pattern.permute.xlu0 3
  %57 = vperm.xlu0 %56, %v21
  %v58 = vpop.permute.xlu0 %57
  %v60 = vlaneseq
  %v61 = vshrl.u32 %v60, 7
  %v62 = vsub.s32 0, %v61
  %v63 = vrot.slane %v55, %v62
  %v64 = vmul.f32 %v58, %v63
  %v65 = vadd.f32 %v54, %v64
  %v66 = vld [vmem:[%s1 + $0x4] sm:$0x1]
  %67 = vset.pattern.permute.xlu0 4
  %68 = vperm.xlu0 %67, %v21
  %v69 = vpop.permute.xlu0 %68
  %v71 = vlaneseq
  %v72 = vshrl.u32 %v71, 7
  %v73 = vsub.s32 0, %v72
  %v74 = vrot.slane %v66, %v73
  %v75 = vmul.f32 %v69, %v74
  %v76 = vadd.f32 %v65, %v75
  %v77 = vld [vmem:[%s1 + $0x5] sm:$0x1]
  %78 = vset.pattern.permute.xlu0 5
  %79 = vperm.xlu0 %78, %v21
  %v80 = vpop.permute.xlu0 %79
  %v82 = vlaneseq
  %v83 = vshrl.u32 %v82, 7
  %v84 = vsub.s32 0, %v83
  %v85 = vrot.slane %v77, %v84
  %v86 = vmul.f32 %v80, %v85
  %v87 = vadd.f32 %v76, %v86
  %v88 = vld [vmem:[%s2] sm:$0x1]
  %v90 = vlaneseq
  %v91 = vshrl.u32 %v90, 7
  %v92 = vsub.s32 0, %v91
  %v93 = vrot.slane %v88, %v92
  %v95 = vadd.f32 %v87, %v93
  %v96 = vmax.f32 %v95, 0.0
  %v97 = vpack.c.bf16 %v96, %v96
  %v98 = vld [vmem:[%s3] sm:$0xff]
  %v99 = vld [vmem:[%s3 + $0x8] sm:$0xff]
  %v100 = vld [vmem:[%s3 + $0x10] sm:$0xff]
  %v101 = vld [vmem:[%s3 + $0x18] sm:$0xf]
  %v102 = vld [vmem:[%s3 + $0x1c] sm:$0xff]
  %v103 = vld [vmem:[%s3 + $0x24] sm:$0xff]
  %v104 = vld [vmem:[%s3 + $0x2c] sm:$0xff]
  %v105 = vld [vmem:[%s3 + $0x34] sm:$0xf]
  %v106 = vld [vmem:[%s3 + $0x38] sm:$0xff]
  %v107 = vld [vmem:[%s3 + $0x40] sm:$0xff]
  %v108 = vld [vmem:[%s3 + $0x48] sm:$0xff]
  %v109 = vld [vmem:[%s3 + $0x50] sm:$0xf]
  %v110 = vld [vmem:[%s3 + $0x54] sm:$0xff]
  %v111 = vld [vmem:[%s3 + $0x5c] sm:$0xff]
  %v112 = vld [vmem:[%s3 + $0x64] sm:$0xff]
  %v113 = vld [vmem:[%s3 + $0x6c] sm:$0xf]
  %v114 = vld [vmem:[%s3 + $0x70] sm:$0xff]
  %v115 = vld [vmem:[%s3 + $0x78] sm:$0xff]
  %v116 = vld [vmem:[%s3 + $0x80] sm:$0xff]
  %v117 = vld [vmem:[%s3 + $0x88] sm:$0xf]
  %v118 = vld [vmem:[%s3 + $0x8c] sm:$0xff]
  %v119 = vld [vmem:[%s3 + $0x94] sm:$0xff]
  %v120 = vld [vmem:[%s3 + $0x9c] sm:$0xff]
  %v121 = vld [vmem:[%s3 + $0xa4] sm:$0xf]
  %v122 = vld [vmem:[%s3 + $0xa8] sm:$0xff]
  %v123 = vld [vmem:[%s3 + $0xb0] sm:$0xff]
  %v124 = vld [vmem:[%s3 + $0xb8] sm:$0xff]
  %v125 = vld [vmem:[%s3 + $0xc0] sm:$0xf]
  %v126 = vld [vmem:[%s3 + $0xc4] sm:$0xff]
  %v127 = vld [vmem:[%s3 + $0xcc] sm:$0xff]
  %v128 = vld [vmem:[%s3 + $0xd4] sm:$0xff]
  %v129 = vld [vmem:[%s3 + $0xdc] sm:$0xf]
  %v130 = vld [vmem:[%s3 + $0xe0] sm:$0xff]
  %v131 = vld [vmem:[%s3 + $0xe8] sm:$0xff]
  %v132 = vld [vmem:[%s3 + $0xf0] sm:$0xff]
  %v133 = vld [vmem:[%s3 + $0xf8] sm:$0xf]
  %v134 = vld [vmem:[%s3 + $0xfc] sm:$0xff]
  %v135 = vld [vmem:[%s3 + $0x104] sm:$0xff]
  %v136 = vld [vmem:[%s3 + $0x10c] sm:$0xff]
  %v137 = vld [vmem:[%s3 + $0x114] sm:$0xf]
  %v138 = vld [vmem:[%s3 + $0x118] sm:$0xff]
  %v139 = vld [vmem:[%s3 + $0x120] sm:$0xff]
  %v140 = vld [vmem:[%s3 + $0x128] sm:$0xff]
  %v141 = vld [vmem:[%s3 + $0x130] sm:$0xf]
  %v142 = vld [vmem:[%s3 + $0x134] sm:$0xff]
  %v143 = vld [vmem:[%s3 + $0x13c] sm:$0xff]
  %v144 = vld [vmem:[%s3 + $0x144] sm:$0xff]
  %v145 = vld [vmem:[%s3 + $0x14c] sm:$0xf]
  %v146 = vld [vmem:[%s3 + $0x150] sm:$0xff]
  %v147 = vld [vmem:[%s3 + $0x158] sm:$0xff]
  %v148 = vld [vmem:[%s3 + $0x160] sm:$0xff]
  %v149 = vld [vmem:[%s3 + $0x168] sm:$0xf]
  %v150 = vld [vmem:[%s3 + $0x16c] sm:$0xff]
  %v151 = vld [vmem:[%s3 + $0x174] sm:$0xff]
  %v152 = vld [vmem:[%s3 + $0x17c] sm:$0xff]
  %v153 = vld [vmem:[%s3 + $0x184] sm:$0xf]
  %v154 = vld [vmem:[%s3 + $0x188] sm:$0xff]
  %v155 = vld [vmem:[%s3 + $0x190] sm:$0xff]
  %v156 = vld [vmem:[%s3 + $0x198] sm:$0xff]
  %v157 = vld [vmem:[%s3 + $0x1a0] sm:$0xf]
  %v158 = vld [vmem:[%s3 + $0x1a4] sm:$0xff]
  %v159 = vld [vmem:[%s3 + $0x1ac] sm:$0xff]
  %v160 = vld [vmem:[%s3 + $0x1b4] sm:$0xff]
  %v161 = vld [vmem:[%s3 + $0x1bc] sm:$0xf]
  %v162 = vld [vmem:[%s4] sm:$0x7f]
  %v164 = vlaneseq
  %v165 = vshrl.u32 %v164, 7
  %v166 = vsub.s32 0, %v165
  %v167 = vrot.slane %v162, %v166
  %v168 = vlaneseq
  %v169 = vshrl.u32 %v168, 7
  %v170 = vsub.s32 1, %v169
  %v171 = vrot.slane %v162, %v170
  %v172 = vlaneseq
  %v173 = vshrl.u32 %v172, 7
  %v174 = vsub.s32 2, %v173
  %v175 = vrot.slane %v162, %v174
  %v176 = vlaneseq
  %v177 = vshrl.u32 %v176, 7
  %v178 = vsub.s32 3, %v177
  %v179 = vrot.slane %v162, %v178
  %v180 = vlaneseq
  %v181 = vshrl.u32 %v180, 7
  %v182 = vsub.s32 4, %v181
  %v183 = vrot.slane %v162, %v182
  %v184 = vlaneseq
  %v185 = vshrl.u32 %v184, 7
  %v186 = vsub.s32 5, %v185
  %v187 = vrot.slane %v162, %v186
  %v188 = vlaneseq
  %v189 = vshrl.u32 %v188, 7
  %v190 = vsub.s32 6, %v189
  %v191 = vrot.slane %v162, %v190
  %v263 = vunpack.c.l.b16 %v98
  %v264 = vunpack.c.h.b16 %v98
  %v265 = vunpack.c.l.b16 %v99
  %v266 = vunpack.c.h.b16 %v99
  %v267 = vunpack.c.l.b16 %v100
  %v268 = vunpack.c.h.b16 %v100
  %v269 = vunpack.c.l.b16 %v101
  %v270 = vunpack.c.l.b16 %v102
  %v271 = vunpack.c.h.b16 %v102
  %v272 = vunpack.c.l.b16 %v103
  %v273 = vunpack.c.h.b16 %v103
  %v274 = vunpack.c.l.b16 %v104
  %v275 = vunpack.c.h.b16 %v104
  %v276 = vunpack.c.l.b16 %v105
  %v277 = vunpack.c.l.b16 %v106
  %v278 = vunpack.c.h.b16 %v106
  %v279 = vunpack.c.l.b16 %v107
  %v280 = vunpack.c.h.b16 %v107
  %v281 = vunpack.c.l.b16 %v108
  %v282 = vunpack.c.h.b16 %v108
  %v283 = vunpack.c.l.b16 %v109
  %v284 = vunpack.c.l.b16 %v110
  %v285 = vunpack.c.h.b16 %v110
  %v286 = vunpack.c.l.b16 %v111
  %v287 = vunpack.c.h.b16 %v111
  %v288 = vunpack.c.l.b16 %v112
  %v289 = vunpack.c.h.b16 %v112
  %v290 = vunpack.c.l.b16 %v113
  %v291 = vunpack.c.l.b16 %v114
  %v292 = vunpack.c.h.b16 %v114
  %v293 = vunpack.c.l.b16 %v115
  %v294 = vunpack.c.h.b16 %v115
  %v295 = vunpack.c.l.b16 %v116
  %v296 = vunpack.c.h.b16 %v116
  %v297 = vunpack.c.l.b16 %v117
  %v298 = vunpack.c.l.b16 %v118
  %v299 = vunpack.c.h.b16 %v118
  %v300 = vunpack.c.l.b16 %v119
  %v301 = vunpack.c.h.b16 %v119
  %v302 = vunpack.c.l.b16 %v120
  %v303 = vunpack.c.h.b16 %v120
  %v304 = vunpack.c.l.b16 %v121
  %v305 = vunpack.c.l.b16 %v122
  %v306 = vunpack.c.h.b16 %v122
  %v307 = vunpack.c.l.b16 %v123
  %v308 = vunpack.c.h.b16 %v123
  %v309 = vunpack.c.l.b16 %v124
  %v310 = vunpack.c.h.b16 %v124
  %v311 = vunpack.c.l.b16 %v125
  %v312 = vunpack.c.l.b16 %v126
  %v313 = vunpack.c.h.b16 %v126
  %v314 = vunpack.c.l.b16 %v127
  %v315 = vunpack.c.h.b16 %v127
  %v316 = vunpack.c.l.b16 %v128
  %v317 = vunpack.c.h.b16 %v128
  %v318 = vunpack.c.l.b16 %v129
  %v319 = vunpack.c.l.b16 %v130
  %v320 = vunpack.c.h.b16 %v130
  %v321 = vunpack.c.l.b16 %v131
  %v322 = vunpack.c.h.b16 %v131
  %v323 = vunpack.c.l.b16 %v132
  %v324 = vunpack.c.h.b16 %v132
  %v325 = vunpack.c.l.b16 %v133
  %v326 = vunpack.c.l.b16 %v134
  %v327 = vunpack.c.h.b16 %v134
  %v328 = vunpack.c.l.b16 %v135
  %v329 = vunpack.c.h.b16 %v135
  %v330 = vunpack.c.l.b16 %v136
  %v331 = vunpack.c.h.b16 %v136
  %v332 = vunpack.c.l.b16 %v137
  %v333 = vunpack.c.l.b16 %v138
  %v334 = vunpack.c.h.b16 %v138
  %v335 = vunpack.c.l.b16 %v139
  %v336 = vunpack.c.h.b16 %v139
  %v337 = vunpack.c.l.b16 %v140
  %v338 = vunpack.c.h.b16 %v140
  %v339 = vunpack.c.l.b16 %v141
  %v340 = vunpack.c.l.b16 %v142
  %v341 = vunpack.c.h.b16 %v142
  %v342 = vunpack.c.l.b16 %v143
  %v343 = vunpack.c.h.b16 %v143
  %v344 = vunpack.c.l.b16 %v144
  %v345 = vunpack.c.h.b16 %v144
  %v346 = vunpack.c.l.b16 %v145
  %v347 = vunpack.c.l.b16 %v146
  %v348 = vunpack.c.h.b16 %v146
  %v349 = vunpack.c.l.b16 %v147
  %v350 = vunpack.c.h.b16 %v147
  %v351 = vunpack.c.l.b16 %v148
  %v352 = vunpack.c.h.b16 %v148
  %v353 = vunpack.c.l.b16 %v149
  %v354 = vunpack.c.l.b16 %v150
  %v355 = vunpack.c.h.b16 %v150
  %v356 = vunpack.c.l.b16 %v151
  %v357 = vunpack.c.h.b16 %v151
  %v358 = vunpack.c.l.b16 %v152
  %v359 = vunpack.c.h.b16 %v152
  %v360 = vunpack.c.l.b16 %v153
  %v361 = vunpack.c.l.b16 %v154
  %v362 = vunpack.c.h.b16 %v154
  %v363 = vunpack.c.l.b16 %v155
  %v364 = vunpack.c.h.b16 %v155
  %v365 = vunpack.c.l.b16 %v156
  %v366 = vunpack.c.h.b16 %v156
  %v367 = vunpack.c.l.b16 %v157
  %v368 = vunpack.c.l.b16 %v158
  %v369 = vunpack.c.h.b16 %v158
  %v370 = vunpack.c.l.b16 %v159
  %v371 = vunpack.c.h.b16 %v159
  %v372 = vunpack.c.l.b16 %v160
  %v373 = vunpack.c.h.b16 %v160
  %v374 = vunpack.c.l.b16 %v161
  %v375 = vpack.c.b16 %v270, %v263
  %v376 = vpack.c.b16 %v271, %v264
  %v377 = vpack.c.b16 %v272, %v265
  %v378 = vpack.c.b16 %v273, %v266
  %v379 = vpack.c.b16 %v274, %v267
  %v380 = vpack.c.b16 %v275, %v268
  %v381 = vpack.c.b16 %v276, %v269
  %v382 = vpack.c.b16 %v284, %v277
  %v383 = vpack.c.b16 %v285, %v278
  %v384 = vpack.c.b16 %v286, %v279
  %v385 = vpack.c.b16 %v287, %v280
  %v386 = vpack.c.b16 %v288, %v281
  %v387 = vpack.c.b16 %v289, %v282
  %v388 = vpack.c.b16 %v290, %v283
  %v389 = vpack.c.b16 %v298, %v291
  %v390 = vpack.c.b16 %v299, %v292
  %v391 = vpack.c.b16 %v300, %v293
  %v392 = vpack.c.b16 %v301, %v294
  %v393 = vpack.c.b16 %v302, %v295
  %v394 = vpack.c.b16 %v303, %v296
  %v395 = vpack.c.b16 %v304, %v297
  %v396 = vpack.c.b16 %v312, %v305
  %v397 = vpack.c.b16 %v313, %v306
  %v398 = vpack.c.b16 %v314, %v307
  %v399 = vpack.c.b16 %v315, %v308
  %v400 = vpack.c.b16 %v316, %v309
  %v401 = vpack.c.b16 %v317, %v310
  %v402 = vpack.c.b16 %v318, %v311
  %v403 = vpack.c.b16 %v326, %v319
  %v404 = vpack.c.b16 %v327, %v320
  %v405 = vpack.c.b16 %v328, %v321
  %v406 = vpack.c.b16 %v329, %v322
  %v407 = vpack.c.b16 %v330, %v323
  %v408 = vpack.c.b16 %v331, %v324
  %v409 = vpack.c.b16 %v332, %v325
  %v410 = vpack.c.b16 %v340, %v333
  %v411 = vpack.c.b16 %v341, %v334
  %v412 = vpack.c.b16 %v342, %v335
  %v413 = vpack.c.b16 %v343, %v336
  %v414 = vpack.c.b16 %v344, %v337
  %v415 = vpack.c.b16 %v345, %v338
  %v416 = vpack.c.b16 %v346, %v339
  %v417 = vpack.c.b16 %v354, %v347
  %v418 = vpack.c.b16 %v355, %v348
  %v419 = vpack.c.b16 %v356, %v349
  %v420 = vpack.c.b16 %v357, %v350
  %v421 = vpack.c.b16 %v358, %v351
  %v422 = vpack.c.b16 %v359, %v352
  %v423 = vpack.c.b16 %v360, %v353
  %v424 = vpack.c.b16 %v368, %v361
  %v425 = vpack.c.b16 %v369, %v362
  %v426 = vpack.c.b16 %v370, %v363
  %v427 = vpack.c.b16 %v371, %v364
  %v428 = vpack.c.b16 %v372, %v365
  %v429 = vpack.c.b16 %v373, %v366
  %v430 = vpack.c.b16 %v374, %v367
  %487 = vmatprep.subr.bf16.mxu0 %v425
  %488 = vmatpush1.bf16.msra.mxu0 %v424
  %489 = vmatprep.subr.bf16.mxu0 %v418
  %490 = vmatpush1.bf16.msra.mxu0 %v417
  %491 = vmatprep.subr.bf16.mxu0 %v411
  %492 = vmatpush1.bf16.msra.mxu0 %v410
  %493 = vmatprep.subr.bf16.mxu0 %v404
  %494 = vmatpush1.bf16.msra.mxu0 %v403
  %495 = vmatprep.subr.bf16.mxu0 %v397
  %496 = vmatpush1.bf16.msra.mxu0 %v396
  %497 = vmatprep.subr.bf16.mxu0 %v390
  %498 = vmatpush1.bf16.msra.mxu0 %v389
  %499 = vmatprep.subr.bf16.mxu0 %v383
  %500 = vmatpush1.bf16.msra.mxu0 %v382
  %501 = vmatprep.subr.bf16.mxu0 %v376
  %502 = vmatpush1.bf16.msra.mxu0 %v375
  %503 = vmatprep.subr.bf16.mxu0 0
  %504 = vmatpush2.bf16.msra.mxu0 0
  %505 = vmatprep.subr.bf16.mxu0 0
  %506 = vmatpush2.bf16.msra.mxu0 0
  %507 = vmatprep.subr.bf16.mxu0 0
  %508 = vmatpush2.bf16.msra.mxu0 0
  %509 = vmatprep.subr.bf16.mxu0 0
  %510 = vmatpush2.bf16.msra.mxu0 0
  %511 = vmatprep.subr.bf16.mxu0 0
  %512 = vmatpush2.bf16.msra.mxu0 0
  %513 = vmatprep.subr.bf16.mxu0 0
  %514 = vmatpush2.bf16.msra.mxu0 0
  %515 = vmatprep.subr.bf16.mxu0 0
  %516 = vmatpush2.bf16.msra.mxu0 0
  %517 = vmatprep.subr.bf16.mxu0 0
  %518 = vmatpush2.bf16.msra.mxu0 0
  %519 = vmatprep.mubr.bf16.mxu0 0
  %520 = vmatmul.mubr.bf16.gmra.mxu0 %v97
  %v521 = vpop.f32.mrf.mxu0
  %v522 = vadd.f32 %v167, %v521
  %v523 = vpop.f32.mrf.mxu0
  %v524 = vadd.f32 %v171, %v523
  %v525 = vpop.f32.mrf.mxu0
  %v526 = vpop.f32.mrf.mxu0
  %527 = vdwg.mxu0
  %528 = vmatprep.subr.bf16.mxu0 %v427
  %529 = vmatpush1.bf16.msra.mxu0 %v426
  %530 = vmatprep.subr.bf16.mxu0 %v420
  %531 = vmatpush1.bf16.msra.mxu0 %v419
  %532 = vmatprep.subr.bf16.mxu0 %v413
  %533 = vmatpush1.bf16.msra.mxu0 %v412
  %534 = vmatprep.subr.bf16.mxu0 %v406
  %535 = vmatpush1.bf16.msra.mxu0 %v405
  %536 = vmatprep.subr.bf16.mxu0 %v399
  %537 = vmatpush1.bf16.msra.mxu0 %v398
  %538 = vmatprep.subr.bf16.mxu0 %v392
  %539 = vmatpush1.bf16.msra.mxu0 %v391
  %540 = vmatprep.subr.bf16.mxu0 %v385
  %541 = vmatpush1.bf16.msra.mxu0 %v384
  %542 = vmatprep.subr.bf16.mxu0 %v378
  %543 = vmatpush1.bf16.msra.mxu0 %v377
  %544 = vmatprep.subr.bf16.mxu0 0
  %545 = vmatpush2.bf16.msra.mxu0 0
  %546 = vmatprep.subr.bf16.mxu0 0
  %547 = vmatpush2.bf16.msra.mxu0 0
  %548 = vmatprep.subr.bf16.mxu0 0
  %549 = vmatpush2.bf16.msra.mxu0 0
  %550 = vmatprep.subr.bf16.mxu0 0
  %551 = vmatpush2.bf16.msra.mxu0 0
  %552 = vmatprep.subr.bf16.mxu0 0
  %553 = vmatpush2.bf16.msra.mxu0 0
  %554 = vmatprep.subr.bf16.mxu0 0
  %555 = vmatpush2.bf16.msra.mxu0 0
  %556 = vmatprep.subr.bf16.mxu0 0
  %557 = vmatpush2.bf16.msra.mxu0 0
  %558 = vmatprep.subr.bf16.mxu0 0
  %559 = vmatpush2.bf16.msra.mxu0 0
  %560 = vmatprep.mubr.bf16.mxu0 0
  %561 = vmatmul.mubr.bf16.gmra.mxu0 %v97
  %v562 = vpop.f32.mrf.mxu0
  %v563 = vadd.f32 %v175, %v562
  %v564 = vpop.f32.mrf.mxu0
  %v565 = vadd.f32 %v179, %v564
  %v566 = vpop.f32.mrf.mxu0
  %v567 = vpop.f32.mrf.mxu0
  %568 = vdwg.mxu0
  %569 = vmatprep.subr.bf16.mxu0 %v429
  %570 = vmatpush1.bf16.msra.mxu0 %v428
  %571 = vmatprep.subr.bf16.mxu0 %v422
  %572 = vmatpush1.bf16.msra.mxu0 %v421
  %573 = vmatprep.subr.bf16.mxu0 %v415
  %574 = vmatpush1.bf16.msra.mxu0 %v414
  %575 = vmatprep.subr.bf16.mxu0 %v408
  %576 = vmatpush1.bf16.msra.mxu0 %v407
  %577 = vmatprep.subr.bf16.mxu0 %v401
  %578 = vmatpush1.bf16.msra.mxu0 %v400
  %579 = vmatprep.subr.bf16.mxu0 %v394
  %580 = vmatpush1.bf16.msra.mxu0 %v393
  %581 = vmatprep.subr.bf16.mxu0 %v387
  %582 = vmatpush1.bf16.msra.mxu0 %v386
  %583 = vmatprep.subr.bf16.mxu0 %v380
  %584 = vmatpush1.bf16.msra.mxu0 %v379
  %585 = vmatprep.subr.bf16.mxu0 0
  %586 = vmatpush2.bf16.msra.mxu0 0
  %587 = vmatprep.subr.bf16.mxu0 0
  %588 = vmatpush2.bf16.msra.mxu0 0
  %589 = vmatprep.subr.bf16.mxu0 0
  %590 = vmatpush2.bf16.msra.mxu0 0
  %591 = vmatprep.subr.bf16.mxu0 0
  %592 = vmatpush2.bf16.msra.mxu0 0
  %593 = vmatprep.subr.bf16.mxu0 0
  %594 = vmatpush2.bf16.msra.mxu0 0
  %595 = vmatprep.subr.bf16.mxu0 0
  %596 = vmatpush2.bf16.msra.mxu0 0
  %597 = vmatprep.subr.bf16.mxu0 0
  %598 = vmatpush2.bf16.msra.mxu0 0
  %599 = vmatprep.subr.bf16.mxu0 0
  %600 = vmatpush2.bf16.msra.mxu0 0
  %601 = vmatprep.mubr.bf16.mxu0 0
  %602 = vmatmul.mubr.bf16.gmra.mxu0 %v97
  %v603 = vpop.f32.mrf.mxu0
  %v604 = vadd.f32 %v183, %v603
  %v605 = vpop.f32.mrf.mxu0
  %v606 = vadd.f32 %v187, %v605
  %v607 = vpop.f32.mrf.mxu0
  %v608 = vpop.f32.mrf.mxu0
  %609 = vdwg.mxu0
  %610 = vmatprep.subr.bf16.mxu0 0
  %611 = vmatpush1.bf16.msra.mxu0 %v430
  %612 = vmatprep.subr.bf16.mxu0 0
  %613 = vmatpush1.bf16.msra.mxu0 %v423
  %614 = vmatprep.subr.bf16.mxu0 0
  %615 = vmatpush1.bf16.msra.mxu0 %v416
  %616 = vmatprep.subr.bf16.mxu0 0
  %617 = vmatpush1.bf16.msra.mxu0 %v409
  %618 = vmatprep.subr.bf16.mxu0 0
  %619 = vmatpush1.bf16.msra.mxu0 %v402
  %620 = vmatprep.subr.bf16.mxu0 0
  %621 = vmatpush1.bf16.msra.mxu0 %v395
  %622 = vmatprep.subr.bf16.mxu0 0
  %623 = vmatpush1.bf16.msra.mxu0 %v388
  %624 = vmatprep.subr.bf16.mxu0 0
  %625 = vmatpush1.bf16.msra.mxu0 %v381
  %626 = vmatprep.subr.bf16.mxu0 0
  %627 = vmatpush2.bf16.msra.mxu0 0
  %628 = vmatprep.subr.bf16.mxu0 0
  %629 = vmatpush2.bf16.msra.mxu0 0
  %630 = vmatprep.subr.bf16.mxu0 0
  %631 = vmatpush2.bf16.msra.mxu0 0
  %632 = vmatprep.subr.bf16.mxu0 0
  %633 = vmatpush2.bf16.msra.mxu0 0
  %634 = vmatprep.subr.bf16.mxu0 0
  %635 = vmatpush2.bf16.msra.mxu0 0
  %636 = vmatprep.subr.bf16.mxu0 0
  %637 = vmatpush2.bf16.msra.mxu0 0
  %638 = vmatprep.subr.bf16.mxu0 0
  %639 = vmatpush2.bf16.msra.mxu0 0
  %640 = vmatprep.subr.bf16.mxu0 0
  %641 = vmatpush2.bf16.msra.mxu0 0
  %642 = vmatprep.mubr.bf16.mxu0 0
  %643 = vmatmul.mubr.bf16.gmra.mxu0 %v97
  %v644 = vpop.f32.mrf.mxu0
  %v645 = vadd.f32 %v191, %v644
  %v646 = vpop.f32.mrf.mxu0
  %v647 = vpop.f32.mrf.mxu0
  %v648 = vpop.f32.mrf.mxu0
  %649 = vdwg.mxu0
  %v650 = vmax.f32 %v522, 0.0
  %v651 = vmax.f32 %v524, 0.0
  %v652 = vmax.f32 %v563, 0.0
  %v653 = vmax.f32 %v565, 0.0
  %v654 = vmax.f32 %v604, 0.0
  %v655 = vmax.f32 %v606, 0.0
  %v656 = vmax.f32 %v645, 0.0
  %657 = vst [vmem:[%s5] sm:$0xff] %v650
  %658 = vst [vmem:[%s5 + $0x8] sm:$0xff] %v651
  %659 = vst [vmem:[%s5 + $0x10] sm:$0xff] %v652
  %660 = vst [vmem:[%s5 + $0x18] sm:$0xff] %v653
  %661 = vst [vmem:[%s5 + $0x20] sm:$0xff] %v654
  %662 = vst [vmem:[%s5 + $0x28] sm:$0xff] %v655
  %vm663 = vcmask 130048
  %664 = vst.msk [vmem:[%s5 + $0x30] sm:$0xff] %vm663, %v656
  // Predicated region
  $region22: #{state_stack_forward.1} parent=0 // pred_check
    _
  $region23: #{state_stack_forward.1} parent=0 // pred_check_branch
    %666 = sbr.rel (0) target = $region25
  $region24: #{state_stack_forward.1} parent=0 // pred_region
    _
  $region25: #{state_stack_forward.1} parent=0 // pred_fallthru
    _
  // Predicated region
  $region26: #{state_stack_forward.1} parent=0 // pred_check
    _
  $region27: #{state_stack_forward.1} parent=0 // pred_check_branch
    %668 = sbr.rel (0) target = $region29
  $region28: #{state_stack_forward.1} parent=0 // pred_region
    _
  $region29: #{state_stack_forward.1} parent=0 // pred_fallthru
    _

</llo_original>
